<compile_context>
chip_gen: v6e
topology: v6e:2x2x1
jax: 0.10.0
libtpu: 0.0.40
codegen_flags: <defaults>
</compile_context>

<pallas_src>
import jax
import jax.numpy as jnp
from jax import lax
from jax.experimental import pallas as pl
from jax.experimental.pallas import tpu as pltpu


_H1 = 128          # fused hidden width (64 state lanes + 64 action lanes)
_H2 = 32           # fc_q output width (zero-padded to 128 lanes in the slab)
_SLAB_ROWS = 144   # 8 (layer-1 rows) + 128 (Wq^T) + 8 (bq / wo / bo tail)
_LANE = 128
_SMALL_BATCH = 256  # below this, a single grid step (splitting isn't worth it)


def _round_up(n: int, m: int) -> int:
    return (n + m - 1) // m * m


def _choose_tile(B: int, tile_b: int) -> int:
    """Pick the batch tile.

    Small batches: one tile (rows rounded up to a sublane multiple of 8).
    Large batches: lane-aligned (multiple-of-128) tiles capped at tile_b, but
    clamped so the grid has >= 2 steps -> both v7x TensorCores get work on the
    "parallel" batch axis. Lane alignment also keeps the (1, tb) output block
    legal against the (1, grid*tb) output array.
    """
    if B <= _SMALL_BATCH:
        return _round_up(max(B, 1), 8)
    tb = min(tile_b, _round_up(pl.cdiv(B, 2), _LANE))
    return max(_LANE, _round_up(tb, _LANE))


# ---------------------------------------------------------------------------
# Kernel
# ---------------------------------------------------------------------------
def _critic_kernel(x_ref, a_ref, slab_ref, out_ref):
    x = x_ref[...]                         # (tb, 2)
    a = a_ref[...]                         # (tb, 1)

    # ---- layer 1: relu(fc_s(x)) ++ relu(fc_a(a)) on the VPU ---------------
    # Slab rows 0..1 hold Ws^T in lanes 0:64 (zeros elsewhere), row 2 holds
    # Wa^T in lanes 64:128, row 3 holds [bs | ba].  Three broadcast
    # multiply-adds reproduce the block-diagonal layer-1 matmul exactly and
    # keep the MXU free for fc_q (K=3 would leave the MXU >95% idle anyway).
    h1 = jnp.maximum(
        x[:, 0:1] * slab_ref[0:1, :]
        + x[:, 1:2] * slab_ref[1:2, :]
        + a[:, 0:1] * slab_ref[2:3, :]
        + slab_ref[3:4, :],
        0.0)                                                     # (tb, 128)

    # ---- fc_q + relu on the MXU -------------------------------------------
    # Columns 32:128 of Wq^T and bq are zero, so q[:, 32:] == 0 exactly and
    # contributes nothing downstream.
    q = jnp.maximum(
        jnp.dot(h1, slab_ref[8:136, :], preferred_element_type=jnp.float32)
        + slab_ref[136:137, :],
        0.0)                                                     # (tb, 128)

    # ---- fc_out: (1,128) . q^T -> lane-dense (1, tb) row --------------------
    # Contracting the last dims directly yields a lane-major row, so the store
    # is an unmasked, dense vst (no (tb,1) masked single-lane stores).
    out_row = lax.dot_general(
        slab_ref[137:138, :], q,
        dimension_numbers=(((1,), (1,)), ((), ())),
        preferred_element_type=jnp.float32)                      # (1, tb)
    out_ref[...] = (out_row + slab_ref[138:139, 0:1]).astype(out_ref.dtype)


# ---------------------------------------------------------------------------
# One-time parameter packing (hoisted out of the per-call path)
# ---------------------------------------------------------------------------
def pack_critic_params(p):
    """Pack all weights/biases into a single (144, 128) f32 slab.

    Rows 0:2    : Ws^T (2, 64) in lanes 0:64   (fc_s weight)
    Row  2      : Wa^T (1, 64) in lanes 64:128 (fc_a weight)
    Row  3      : [bs | ba]
    Rows 4:8    : zero padding (keeps Wq^T sublane-aligned at row 8)
    Rows 8:136  : fc_q weight^T (128, 32) zero-padded to 128 lanes
    Row  136    : fc_q bias (lanes 0:32)
    Row  137    : fc_out weight (lanes 0:32)
    Row  138[0] : fc_out bias
    """
    ws, bs = p["fc_s_w"], p["fc_s_b"]        # (64, 2), (64,)
    wa, ba = p["fc_a_w"], p["fc_a_b"]        # (64, 1), (64,)
    wq, bq = p["fc_q_w"], p["fc_q_b"]        # (32, 128), (32,)
    wo, bo = p["fc_out_w"], p["fc_out_b"]    # (1, 32), (1,)

    slab = jnp.zeros((_SLAB_ROWS, _H1), jnp.float32)
    slab = slab.at[0:2, 0:64].set(ws.T.astype(jnp.float32))
    slab = slab.at[2:3, 64:128].set(wa.T.astype(jnp.float32))
    slab = slab.at[3, 0:64].set(bs.astype(jnp.float32))
    slab = slab.at[3, 64:128].set(ba.astype(jnp.float32))
    slab = slab.at[8:136, 0:_H2].set(wq.T.astype(jnp.float32))
    slab = slab.at[136, 0:_H2].set(bq.astype(jnp.float32))
    slab = slab.at[137, 0:_H2].set(wo[0].astype(jnp.float32))
    slab = slab.at[138, 0].set(bo[0].astype(jnp.float32))
    return slab


# ---------------------------------------------------------------------------
# Forward wrapper
# ---------------------------------------------------------------------------
def critic_forward(x, a, slab, *, tile_b=512):
    """x: (B, 2) f32, a: (B, 1) f32, slab: pack_critic_params(...) -> (B, 1)."""
    B = x.shape[0]
    tb = _choose_tile(B, tile_b)
    grid = pl.cdiv(B, tb)

    flops = 2 * grid * tb * (4 * _H1 + _H1 * _H1 + _H1)
    bytes_accessed = 4 * (x.size + a.size + slab.size + grid * tb)

    out = pl.pallas_call(
        _critic_kernel,
        out_shape=jax.ShapeDtypeStruct((1, grid * tb), jnp.float32),
        grid=(grid,),
        in_specs=[
            # Batch tiles of x and a; last dims equal the full widths (2, 1).
            pl.BlockSpec((tb, 2), lambda i: (i, 0)),
            pl.BlockSpec((tb, 1), lambda i: (i, 0)),
            # Weight slab: constant index_map -> fetched once per core and
            # kept resident across grid steps (no per-step re-DMA).
            pl.BlockSpec((_SLAB_ROWS, _H1), lambda i: (0, 0)),
        ],
        # Lane-dense output row per grid step.
        out_specs=pl.BlockSpec((1, tb), lambda i: (0, i)),
        compiler_params=pltpu.CompilerParams(
            dimension_semantics=("parallel",)),
        cost_estimate=pl.CostEstimate(
            flops=flops, transcendentals=0, bytes_accessed=bytes_accessed),
    )(x.astype(jnp.float32), a.astype(jnp.float32), slab)

    # (1, grid*tb) -> (B, 1).  Rows past B of a partial last tile are garbage
    # computed from uninitialized input rows and are sliced off here; never
    # reduce over them.  When grid*tb == B this is a pure bitcast.
    return out.reshape(-1)[:B].reshape(B, 1)


# ---------------------------------------------------------------------------
# Parameter init + pure-JAX reference (for the self-test)
# ---------------------------------------------------------------------------
def init_params(key):
    """Deterministic init mimicking PyTorch's U(-1/sqrt(fan_in), 1/sqrt(fan_in))."""
    def linear(key, out_f, in_f):
        kw, kb = jax.random.split(key)
        bound = 1.0 / (in_f ** 0.5)
        w = jax.random.uniform(kw, (out_f, in_f), jnp.float32, -bound, bound)
        b = jax.random.uniform(kb, (out_f,), jnp.float32, -bound, bound)
        return w, b

    k1, k2, k3, k4 = jax.random.split(key, 4)
    fc_s_w, fc_s_b = linear(k1, 64, 2)
    fc_a_w, fc_a_b = linear(k2, 64, 1)
    fc_q_w, fc_q_b = linear(k3, 32, 128)
    fc_out_w, fc_out_b = linear(k4, 1, 32)
    return dict(fc_s_w=fc_s_w, fc_s_b=fc_s_b,
                fc_a_w=fc_a_w, fc_a_b=fc_a_b,
                fc_q_w=fc_q_w, fc_q_b=fc_q_b,
                fc_out_w=fc_out_w, fc_out_b=fc_out_b)


def critic_ref(x, a, p):
    """Pure-JAX reference matching the PyTorch forward exactly."""
    s = jax.nn.relu(x @ p["fc_s_w"].T + p["fc_s_b"])
    ah = jax.nn.relu(a @ p["fc_a_w"].T + p["fc_a_b"])
    cat = jnp.concatenate([s, ah], axis=1)
    q = jax.nn.relu(cat @ p["fc_q_w"].T + p["fc_q_b"])
    return q @ p["fc_out_w"].T + p["fc_out_b"]


if __name__ == "__main__":
    key = jax.random.PRNGKey(0)
    kp, kx, ka = jax.random.split(key, 3)

    params = init_params(kp)
    slab = pack_critic_params(params)          # one-time packing, reused per call

    B = 8
    x = jax.random.normal(kx, (B, 2), jnp.float32)   # state:  (batch, 2)
    a = jax.random.normal(ka, (B, 1), jnp.float32)   # action: (batch, 1)

    q = critic_forward(x, a, slab)
    q = jax.block_until_ready(q)

    q_ref = critic_ref(x, a, params)
    assert q.shape == (B, 1), q.shape
    assert jnp.allclose(q, q_ref, atol=1e-3, rtol=1e-3), (q, q_ref)
    print("KERNEL_OK")
</pallas_src>

<mosaic_0001>
module attributes {stable_mosaic.version = 11 : i64} {
  func.func @_critic_kernel(%arg0: i32, %arg1: memref<8x2xf32, #tpu.memory_space<vmem>>, %arg2: memref<8x1xf32, #tpu.memory_space<vmem>>, %arg3: memref<144x128xf32, #tpu.memory_space<vmem>>, %arg4: memref<1x8xf32, #tpu.memory_space<vmem>>) attributes {dimension_semantics = [#tpu.dimension_semantics<parallel>], iteration_bounds = array<i64: 1>, scalar_prefetch = 0 : i64, scratch_operands = 0 : i64, tpu.core_type = #tpu.core_type<tc>, window_params = [{transform_indices = @transform_0, window_bounds = array<i64: 8, 2>}, {transform_indices = @transform_1, window_bounds = array<i64: 8, 1>}, {pipeline_mode = #tpu.pipeline_mode<synchronous>, transform_indices = @transform_2, window_bounds = array<i64: 144, 128>}, {transform_indices = @transform_3, window_bounds = array<i64: 1, 8>}]} {
    %c0 = arith.constant 0 : index
    %c0_0 = arith.constant 0 : index
    %0 = vector.load %arg1[%c0, %c0_0] : memref<8x2xf32, #tpu.memory_space<vmem>>, vector<8x2xf32>
    %c0_1 = arith.constant 0 : index
    %c0_2 = arith.constant 0 : index
    %1 = vector.load %arg2[%c0_1, %c0_2] : memref<8x1xf32, #tpu.memory_space<vmem>>, vector<8x1xf32>
    %2 = vector.extract_strided_slice %0 {offsets = [0, 0], sizes = [8, 1], strides = [1, 1]} : vector<8x2xf32> to vector<8x1xf32>
    %c0_3 = arith.constant 0 : index
    %c0_4 = arith.constant 0 : index
    %3 = vector.load %arg3[%c0_3, %c0_4] : memref<144x128xf32, #tpu.memory_space<vmem>>, vector<1x128xf32>
    %4 = vector.broadcast %2 : vector<8x1xf32> to vector<8x128xf32>
    %5 = vector.broadcast %3 : vector<1x128xf32> to vector<8x128xf32>
    %6 = arith.mulf %4, %5 : vector<8x128xf32>
    %7 = vector.extract_strided_slice %0 {offsets = [0, 1], sizes = [8, 1], strides = [1, 1]} : vector<8x2xf32> to vector<8x1xf32>
    %c1 = arith.constant 1 : index
    %c0_5 = arith.constant 0 : index
    %8 = vector.load %arg3[%c1, %c0_5] : memref<144x128xf32, #tpu.memory_space<vmem>>, vector<1x128xf32>
    %9 = vector.broadcast %7 : vector<8x1xf32> to vector<8x128xf32>
    %10 = vector.broadcast %8 : vector<1x128xf32> to vector<8x128xf32>
    %11 = arith.mulf %9, %10 : vector<8x128xf32>
    %12 = arith.addf %6, %11 : vector<8x128xf32>
    %c2 = arith.constant 2 : index
    %c0_6 = arith.constant 0 : index
    %13 = vector.load %arg3[%c2, %c0_6] : memref<144x128xf32, #tpu.memory_space<vmem>>, vector<1x128xf32>
    %14 = vector.broadcast %1 : vector<8x1xf32> to vector<8x128xf32>
    %15 = vector.broadcast %13 : vector<1x128xf32> to vector<8x128xf32>
    %16 = arith.mulf %14, %15 : vector<8x128xf32>
    %17 = arith.addf %12, %16 : vector<8x128xf32>
    %c3 = arith.constant 3 : index
    %c0_7 = arith.constant 0 : index
    %18 = vector.load %arg3[%c3, %c0_7] : memref<144x128xf32, #tpu.memory_space<vmem>>, vector<1x128xf32>
    %19 = vector.broadcast %18 : vector<1x128xf32> to vector<8x128xf32>
    %20 = arith.addf %17, %19 : vector<8x128xf32>
    %cst = arith.constant 0.000000e+00 : f32
    %21 = vector.broadcast %cst : f32 to vector<8x128xf32>
    %22 = arith.maximumf %20, %21 : vector<8x128xf32>
    %c8 = arith.constant 8 : index
    %c0_8 = arith.constant 0 : index
    %23 = vector.load %arg3[%c8, %c0_8] : memref<144x128xf32, #tpu.memory_space<vmem>>, vector<128x128xf32>
    %cst_9 = arith.constant dense<0.000000e+00> : vector<8x128xf32>
    %24 = tpu.matmul %22, %23, %cst_9 {dimension_numbers = #tpu.dot_dimension_numbers<[1], [0], [0], [1], [0, 0, 1, 1], [], []>} : vector<8x128xf32>, vector<128x128xf32>, vector<8x128xf32> -> vector<8x128xf32>
    %c136 = arith.constant 136 : index
    %c0_10 = arith.constant 0 : index
    %25 = vector.load %arg3[%c136, %c0_10] : memref<144x128xf32, #tpu.memory_space<vmem>>, vector<1x128xf32>
    %26 = vector.broadcast %25 : vector<1x128xf32> to vector<8x128xf32>
    %27 = arith.addf %24, %26 : vector<8x128xf32>
    %cst_11 = arith.constant 0.000000e+00 : f32
    %28 = vector.broadcast %cst_11 : f32 to vector<8x128xf32>
    %29 = arith.maximumf %27, %28 : vector<8x128xf32>
    %c137 = arith.constant 137 : index
    %c0_12 = arith.constant 0 : index
    %30 = vector.load %arg3[%c137, %c0_12] : memref<144x128xf32, #tpu.memory_space<vmem>>, vector<1x128xf32>
    %cst_13 = arith.constant dense<0.000000e+00> : vector<1x8xf32>
    %31 = tpu.matmul %30, %29, %cst_13 {dimension_numbers = #tpu.dot_dimension_numbers<[1], [1], [0], [0], [0, 0, 1, 0], [], []>} : vector<1x128xf32>, vector<8x128xf32>, vector<1x8xf32> -> vector<1x8xf32>
    %c138 = arith.constant 138 : index
    %c0_14 = arith.constant 0 : index
    %32 = vector.load %arg3[%c138, %c0_14] : memref<144x128xf32, #tpu.memory_space<vmem>>, vector<1x1xf32>
    %33 = vector.broadcast %32 : vector<1x1xf32> to vector<1x8xf32>
    %34 = arith.addf %31, %33 : vector<1x8xf32>
    %c0_15 = arith.constant 0 : index
    %c0_16 = arith.constant 0 : index
    %35 = vector.load %arg4[%c0_15, %c0_16] : memref<1x8xf32, #tpu.memory_space<vmem>>, vector<1x8xf32>
    tpu.vector_store %arg4[%c0_15, %c0_16], %34 {strides = array<i32>} : memref<1x8xf32, #tpu.memory_space<vmem>>, vector<1x8xf32>,
    return
  }
  func.func @transform_0(%arg0: i32) -> (i32, i32) {
    %c0_i32 = arith.constant 0 : i32
    %c0_i32_0 = arith.constant 0 : i32
    return %arg0, %c0_i32 : i32, i32
  }
  func.func @transform_1(%arg0: i32) -> (i32, i32) {
    %c0_i32 = arith.constant 0 : i32
    %c0_i32_0 = arith.constant 0 : i32
    return %arg0, %c0_i32 : i32, i32
  }
  func.func @transform_2(%arg0: i32) -> (i32, i32) {
    %c0_i32 = arith.constant 0 : i32
    %c0_i32_0 = arith.constant 0 : i32
    %c0_i32_1 = arith.constant 0 : i32
    return %c0_i32, %c0_i32_0 : i32, i32
  }
  func.func @transform_3(%arg0: i32) -> (i32, i32) {
    %c0_i32 = arith.constant 0 : i32
    %c0_i32_0 = arith.constant 0 : i32
    return %c0_i32, %arg0 : i32, i32
  }
}

</mosaic_0001>

<llo_original>
// kernel: tpu_custom_call.1
$region0: #{tpu_custom_call.1}
  #allocation0 [shape = 'u32[]', space=smem, size = 0x4, offset = 0x4, fixed_abs, tag = 'smem constant byte address 0x4 - core index']
  #allocation1 [shape = 'u32[144,128]{1,0:T(1,128)}', space=vmem, size = 0x12000, scoped, tag = 'internal scratch']
  %s0 = inlined_call_operand.vmem [shape: f32[8,2], index: 0, kind: input, shape index: {}]
  %s1 = inlined_call_operand.vmem [shape: f32[8,1], index: 1, kind: input, shape index: {}]
  %s2 = inlined_call_operand.hbm [shape: f32[144,128], index: 2, kind: input, shape index: {}]
  %s3 = inlined_call_operand.hbm [shape: f32[1,8], index: 3, kind: output, shape index: {}]
  %s4 = sld [smem:[#allocation0]]
  $region26: #{tpu_custom_call.1} parent=0
    _
  %s6 = ssub.s32 1, %s4
  %s7 = scalar_select 0, %s6, %s4
  $region1: #{tpu_custom_call.1} parent=0
    #allocation2 [shape = 'u8[73728]{0}', space=vmem, size = 0x12000, scoped, tag = 'input window, operand 2, single buffered']
    #allocation3 [shape = 's32[1]{0}', space=sflag, size = 0x4, scoped, tag = 'scoped memory for tpu_custom_call.1']
    #allocation4 [shape = 's32[1]{0}', space=sflag, size = 0x4, scoped, tag = 'scoped memory for tpu_custom_call.1']
    #allocation5 [shape = 'u8[512]{0}', space=vmem, size = 0x400, scoped, tag = 'output window, operand 0, single buffered']
    %8 = vsyncpa [#allocation3], 0
    %9 = vsyncpa [#allocation4], 0
    // Predicated region
    $region2: #{tpu_custom_call.1} parent=1 // pred_check
      _
    $region3: #{tpu_custom_call.1} parent=1 // pred_check_branch
      %11 = sbr.rel (0) target = $region5
    $region4: #{tpu_custom_call.1} parent=1 // pred_region
      _
    $region5: #{tpu_custom_call.1} parent=1 // pred_fallthru
      _
    // Predicated region
    $region6: #{tpu_custom_call.1} parent=1 // pred_check
      _
    $region7: #{tpu_custom_call.1} parent=1 // pred_check_branch
      %13 = sbr.rel (0) target = $region9
    $region8: #{tpu_custom_call.1} parent=1 // pred_region
      _
    $region9: #{tpu_custom_call.1} parent=1 // pred_fallthru
      _
    // Predicated region
    $region10: #{tpu_custom_call.1} parent=1 // pred_check
      _
    $region11: #{tpu_custom_call.1} parent=1 // pred_check_branch
      %15 = sbr.rel (0) target = $region13
    $region12: #{tpu_custom_call.1} parent=1 // pred_region
      %s17 = ssub.s32 2304, 2304
      %18 = vsyncadd [#allocation3], %s17
      %s19 = sshll.u32 [#allocation2], 4
      %s20 = int_to_ptr.vmem [resolvable:$true] %s19
      %25 = dma.hbm_to_vmem [thread:$0]  %s2, 2304, %s20, [#allocation3], 128, 128, 8
    $region13: #{tpu_custom_call.1} parent=1 // pred_fallthru
      _
    // Predicated region
    $region14: #{tpu_custom_call.1} parent=1 // pred_check
      _
    $region15: #{tpu_custom_call.1} parent=1 // pred_check_branch
      %27 = sbr.rel (0) target = $region17
    $region16: #{tpu_custom_call.1} parent=1 // pred_region
      %28 = dma.done [#allocation3], 2304
    $region17: #{tpu_custom_call.1} parent=1 // pred_fallthru
      _
    %v29 = vld [vmem:[%s0] sm:$0xff]
    %v30 = vld [vmem:[%s1] sm:$0xff]
    %v31 = vld [vmem:[#allocation2] sm:$0x1]
    %33 = vset.pattern.permute.xlu0 0
    %34 = vperm.xlu0 %33, %v29
    %v35 = vpop.permute.xlu0 %34
    %v37 = vlaneseq
    %v38 = vshrl.u32 %v37, 7
    %v39 = vsub.s32 0, %v38
    %v40 = vrot.slane %v31, %v39
    %v41 = vmul.f32 %v35, %v40
    %v42 = vld [vmem:[#allocation2 + $0x1] sm:$0x1]
    %43 = vset.pattern.permute.xlu0 1
    %44 = vperm.xlu0 %43, %v29
    %v45 = vpop.permute.xlu0 %44
    %v47 = vlaneseq
    %v48 = vshrl.u32 %v47, 7
    %v49 = vsub.s32 0, %v48
    %v50 = vrot.slane %v42, %v49
    %v51 = vmul.f32 %v45, %v50
    %v52 = vadd.f32 %v41, %v51
    %v53 = vld [vmem:[#allocation2 + $0x2] sm:$0x1]
    %55 = vset.pattern.permute.xlu0 0
    %56 = vperm.xlu0 %55, %v30
    %v57 = vpop.permute.xlu0 %56
    %v59 = vlaneseq
    %v60 = vshrl.u32 %v59, 7
    %v61 = vsub.s32 0, %v60
    %v62 = vrot.slane %v53, %v61
    %v63 = vmul.f32 %v57, %v62
    %v64 = vadd.f32 %v52, %v63
    %v65 = vld [vmem:[#allocation2 + $0x3] sm:$0x1]
    %v66 = vlaneseq
    %v67 = vshrl.u32 %v66, 7
    %v68 = vsub.s32 0, %v67
    %v69 = vrot.slane %v65, %v68
    %v70 = vadd.f32 %v64, %v69
    %v71 = vmax.f32 %v70, 0.0
    %v72 = vld [vmem:[#allocation2 + $0x8] sm:$0xff]
    %v73 = vld [vmem:[#allocation2 + $0x10] sm:$0xff]
    %v74 = vld [vmem:[#allocation2 + $0x18] sm:$0xff]
    %v75 = vld [vmem:[#allocation2 + $0x20] sm:$0xff]
    %v76 = vld [vmem:[#allocation2 + $0x28] sm:$0xff]
    %v77 = vld [vmem:[#allocation2 + $0x30] sm:$0xff]
    %v78 = vld [vmem:[#allocation2 + $0x38] sm:$0xff]
    %v79 = vld [vmem:[#allocation2 + $0x40] sm:$0xff]
    %v80 = vld [vmem:[#allocation2 + $0x48] sm:$0xff]
    %v81 = vld [vmem:[#allocation2 + $0x50] sm:$0xff]
    %v82 = vld [vmem:[#allocation2 + $0x58] sm:$0xff]
    %v83 = vld [vmem:[#allocation2 + $0x60] sm:$0xff]
    %v84 = vld [vmem:[#allocation2 + $0x68] sm:$0xff]
    %v85 = vld [vmem:[#allocation2 + $0x70] sm:$0xff]
    %v86 = vld [vmem:[#allocation2 + $0x78] sm:$0xff]
    %v87 = vld [vmem:[#allocation2 + $0x80] sm:$0xff]
    %v88 = vld [vmem:[#allocation2 + $0x88] sm:$0x1]
    %v89 = vlaneseq
    %v90 = vshrl.u32 %v89, 7
    %v91 = vsub.s32 0, %v90
    %v92 = vrot.slane %v88, %v91
    %93 = vmatprep.subr.mxu0 0.0
    %94 = vmatpush1.msra.mxu0 %v87
    %95 = vmatprep.subr.mxu0 0.0
    %96 = vmatpush1.msra.mxu0 %v86
    %97 = vmatprep.subr.mxu0 0.0
    %98 = vmatpush1.msra.mxu0 %v85
    %99 = vmatprep.subr.mxu0 0.0
    %100 = vmatpush1.msra.mxu0 %v84
    %101 = vmatprep.subr.mxu0 0.0
    %102 = vmatpush1.msra.mxu0 %v83
    %103 = vmatprep.subr.mxu0 0.0
    %104 = vmatpush1.msra.mxu0 %v82
    %105 = vmatprep.subr.mxu0 0.0
    %106 = vmatpush1.msra.mxu0 %v81
    %107 = vmatprep.subr.mxu0 0.0
    %108 = vmatpush1.msra.mxu0 %v80
    %109 = vmatprep.subr.mxu0 0.0
    %110 = vmatpush1.msra.mxu0 %v79
    %111 = vmatprep.subr.mxu0 0.0
    %112 = vmatpush1.msra.mxu0 %v78
    %113 = vmatprep.subr.mxu0 0.0
    %114 = vmatpush1.msra.mxu0 %v77
    %115 = vmatprep.subr.mxu0 0.0
    %116 = vmatpush1.msra.mxu0 %v76
    %117 = vmatprep.subr.mxu0 0.0
    %118 = vmatpush1.msra.mxu0 %v75
    %119 = vmatprep.subr.mxu0 0.0
    %120 = vmatpush1.msra.mxu0 %v74
    %121 = vmatprep.subr.mxu0 0.0
    %122 = vmatpush1.msra.mxu0 %v73
    %123 = vmatprep.subr.mxu0 0.0
    %124 = vmatpush1.msra.mxu0 %v72
    %125 = vmatprep.subr.mxu0 0.0
    %126 = vmatpush2.msra.mxu0 0.0
    %127 = vmatprep.subr.mxu0 0.0
    %128 = vmatpush2.msra.mxu0 0.0
    %129 = vmatprep.subr.mxu0 0.0
    %130 = vmatpush2.msra.mxu0 0.0
    %131 = vmatprep.subr.mxu0 0.0
    %132 = vmatpush2.msra.mxu0 0.0
    %133 = vmatprep.subr.mxu0 0.0
    %134 = vmatpush2.msra.mxu0 0.0
    %135 = vmatprep.subr.mxu0 0.0
    %136 = vmatpush2.msra.mxu0 0.0
    %137 = vmatprep.subr.mxu0 0.0
    %138 = vmatpush2.msra.mxu0 0.0
    %139 = vmatprep.subr.mxu0 0.0
    %140 = vmatpush2.msra.mxu0 0.0
    %141 = vmatprep.subr.mxu0 0.0
    %142 = vmatpush2.msra.mxu0 0.0
    %143 = vmatprep.subr.mxu0 0.0
    %144 = vmatpush2.msra.mxu0 0.0
    %145 = vmatprep.subr.mxu0 0.0
    %146 = vmatpush2.msra.mxu0 0.0
    %147 = vmatprep.subr.mxu0 0.0
    %148 = vmatpush2.msra.mxu0 0.0
    %149 = vmatprep.subr.mxu0 0.0
    %150 = vmatpush2.msra.mxu0 0.0
    %151 = vmatprep.subr.mxu0 0.0
    %152 = vmatpush2.msra.mxu0 0.0
    %153 = vmatprep.subr.mxu0 0.0
    %154 = vmatpush2.msra.mxu0 0.0
    %155 = vmatprep.subr.mxu0 0.0
    %156 = vmatpush2.msra.mxu0 0.0
    %157 = vmatprep.mubr.f32.mxu0 0.0
    %158 = vmatmul.mubr.f32.gmra.mxu0 %v71
    %v159 = vpop.f32.mrf.mxu0
    %v160 = vadd.f32 %v92, %v159
    %v161 = vpop.f32.mrf.mxu0
    %162 = vdwg.mxu0
    %v163 = vmax.f32 %v160, 0.0
    %v164 = vld [vmem:[#allocation2 + $0x89] sm:$0x1]
    %v165 = vld [vmem:[#allocation2 + $0x8a] sm:$0x1]
    %167 = vset.pattern.permute.xlu0 0
    %168 = vperm.xlu0 %167, %v165
    %v169 = vpop.permute.xlu0 %168
    %171 = vmatprep.subr.mxu0 0.0
    %172 = vmatpush1.xpose.msra.mxu0 0.0
    %173 = vmatprep.subr.mxu0 0.0
    %174 = vmatpush1.xpose.msra.mxu0 0.0
    %175 = vmatprep.subr.mxu0 0.0
    %176 = vmatpush1.xpose.msra.mxu0 0.0
    %177 = vmatprep.subr.mxu0 0.0
    %178 = vmatpush1.xpose.msra.mxu0 0.0
    %179 = vmatprep.subr.mxu0 0.0
    %180 = vmatpush1.xpose.msra.mxu0 0.0
    %181 = vmatprep.subr.mxu0 0.0
    %182 = vmatpush1.xpose.msra.mxu0 0.0
    %183 = vmatprep.subr.mxu0 0.0
    %184 = vmatpush1.xpose.msra.mxu0 0.0
    %185 = vmatprep.subr.mxu0 0.0
    %186 = vmatpush1.xpose.msra.mxu0 0.0
    %187 = vmatprep.subr.mxu0 0.0
    %188 = vmatpush1.xpose.msra.mxu0 0.0
    %189 = vmatprep.subr.mxu0 0.0
    %190 = vmatpush1.xpose.msra.mxu0 0.0
    %191 = vmatprep.subr.mxu0 0.0
    %192 = vmatpush1.xpose.msra.mxu0 0.0
    %193 = vmatprep.subr.mxu0 0.0
    %194 = vmatpush1.xpose.msra.mxu0 0.0
    %195 = vmatprep.subr.mxu0 0.0
    %196 = vmatpush1.xpose.msra.mxu0 0.0
    %197 = vmatprep.subr.mxu0 0.0
    %198 = vmatpush1.xpose.msra.mxu0 0.0
    %199 = vmatprep.subr.mxu0 0.0
    %200 = vmatpush1.xpose.msra.mxu0 0.0
    %201 = vmatprep.subr.mxu0 0.0
    %202 = vmatpush1.xpose.msra.mxu0 %v163
    %203 = vmatprep.subr.mxu0 0.0
    %204 = vmatpush2.xpose.msra.mxu0 0.0
    %205 = vmatprep.subr.mxu0 0.0
    %206 = vmatpush2.xpose.msra.mxu0 0.0
    %207 = vmatprep.subr.mxu0 0.0
    %208 = vmatpush2.xpose.msra.mxu0 0.0
    %209 = vmatprep.subr.mxu0 0.0
    %210 = vmatpush2.xpose.msra.mxu0 0.0
    %211 = vmatprep.subr.mxu0 0.0
    %212 = vmatpush2.xpose.msra.mxu0 0.0
    %213 = vmatprep.subr.mxu0 0.0
    %214 = vmatpush2.xpose.msra.mxu0 0.0
    %215 = vmatprep.subr.mxu0 0.0
    %216 = vmatpush2.xpose.msra.mxu0 0.0
    %217 = vmatprep.subr.mxu0 0.0
    %218 = vmatpush2.xpose.msra.mxu0 0.0
    %219 = vmatprep.subr.mxu0 0.0
    %220 = vmatpush2.xpose.msra.mxu0 0.0
    %221 = vmatprep.subr.mxu0 0.0
    %222 = vmatpush2.xpose.msra.mxu0 0.0
    %223 = vmatprep.subr.mxu0 0.0
    %224 = vmatpush2.xpose.msra.mxu0 0.0
    %225 = vmatprep.subr.mxu0 0.0
    %226 = vmatpush2.xpose.msra.mxu0 0.0
    %227 = vmatprep.subr.mxu0 0.0
    %228 = vmatpush2.xpose.msra.mxu0 0.0
    %229 = vmatprep.subr.mxu0 0.0
    %230 = vmatpush2.xpose.msra.mxu0 0.0
    %231 = vmatprep.subr.mxu0 0.0
    %232 = vmatpush2.xpose.msra.mxu0 0.0
    %233 = vmatprep.subr.mxu0 0.0
    %234 = vmatpush2.xpose.msra.mxu0 0.0
    %235 = vmatprep.mubr.f32.mxu0 0.0
    %236 = vmatmul.mubr.f32.gmra.mxu0 %v164
    %v237 = vpop.f32.mrf.mxu0
    %v238 = vadd.f32 %v169, %v237
    %v239 = vpop.f32.mrf.mxu0
    %240 = vdwg.mxu0
    %vm241 = vcmask 57344
    %242 = vst.msk [vmem:[#allocation5] sm:$0x1] %vm241, %v238
    // Predicated region
    $region18: #{tpu_custom_call.1} parent=1 // pred_check
      _
    $region19: #{tpu_custom_call.1} parent=1 // pred_check_branch
      %244 = sbr.rel (0) target = $region21
    $region20: #{tpu_custom_call.1} parent=1 // pred_region
      %s246 = ssub.s32 16, 16
      %247 = vsyncadd [#allocation4], %s246
      %s249 = sshll.u32 [#allocation5], 4
      %s250 = int_to_ptr.vmem [resolvable:$true] %s249
      %252 = dma.vmem_to_hbm [thread:$0]  %s250, 16, %s3, [#allocation4]
    $region21: #{tpu_custom_call.1} parent=1 // pred_fallthru
      _
    // Predicated region
    $region22: #{tpu_custom_call.1} parent=1 // pred_check
      _
    $region23: #{tpu_custom_call.1} parent=1 // pred_check_branch
      %254 = sbr.rel (0) target = $region25
    $region24: #{tpu_custom_call.1} parent=1 // pred_region
      %255 = dma.done [#allocation4], 16
    $region25: #{tpu_custom_call.1} parent=1 // pred_fallthru
      _
    %256 = vsyncpa [#allocation3], 1
    %257 = vsyncpa [#allocation4], 1

</llo_original>
